<compile_context>
chip_gen: v7x
topology: tpu7x:2x2x1
jax: 0.10.0
libtpu: 0.0.40
codegen_flags: <defaults>
</compile_context>

<pallas_src>
import jax
import jax.numpy as jnp
from jax.experimental import pallas as pl
from jax.experimental.pallas import tpu as pltpu

LANE = 128  # vreg lane width


def _round_up(n, m):
    return ((n + m - 1) // m) * m


def _cdiv(a, b):
    return (a + b - 1) // b


def _mlp_kernel(x_ref, w1_ref, b1_ref, w2_ref, b2_ref, w3_ref, b3_ref,
                o_ref, h1_acc):
    """Fused fc1+ReLU -> fc2+ReLU -> fc3 with a K-reduction over input_size."""
    k = pl.program_id(1)

    @pl.when(k == 0)
    def _():
        h1_acc[...] = jnp.zeros_like(h1_acc)

    # x may arrive as f32 (no wrapper copy) or bf16 (padded path); MXU wants bf16.
    x = x_ref[...].astype(jnp.bfloat16)
    h1_acc[...] += jnp.dot(x, w1_ref[...], preferred_element_type=jnp.float32)

    @pl.when(k == pl.num_programs(1) - 1)
    def _():
        # fc1 epilogue: bias + ReLU in f32 (v5e VPU has no bf16), then bf16 for MXU.
        h1 = jnp.maximum(h1_acc[...] + b1_ref[...], 0.0).astype(jnp.bfloat16)
        # dropout(0.5): identity in eval/inference mode.
        h2 = jnp.dot(h1, w2_ref[...], preferred_element_type=jnp.float32) + b2_ref[...]
        h2 = jnp.maximum(h2, 0.0).astype(jnp.bfloat16)
        # dropout(0.5): identity in eval/inference mode.
        out = jnp.dot(h2, w3_ref[...], preferred_element_type=jnp.float32) + b3_ref[...]
        o_ref[...] = out.astype(o_ref.dtype)


def _default_vmem_budget():
    try:
        cap = pltpu.get_tpu_info().vmem_capacity_bytes
    except Exception:
        cap = 64 << 20  # conservative: v7x per-TensorCore VMEM
    return int(cap * 3 // 4)  # leave headroom for compiler scratch / semaphores


def prepare_params(params, *, vmem_budget=None):
    """One-time (param-load) padding/casting + K-tiling plan.

    Weights are stored (in_features, out_features) = transpose of PyTorch's
    nn.Linear weight, so the kernel computes x @ W + b.  Padding columns/rows
    are zero in both W and b, so they contribute nothing.
    """
    if vmem_budget is None:
        vmem_budget = _default_vmem_budget()

    w1, b1 = params["w1"], params["b1"]
    w2, b2 = params["w2"], params["b2"]
    w3, b3 = params["w3"], params["b3"]

    K1, H1 = w1.shape          # input_size, 128
    H2 = w2.shape[1]           # 64
    N = w3.shape[1]            # output_size

    H1p = _round_up(H1, LANE)
    H2p = _round_up(H2, LANE)
    Np = _round_up(N, LANE)

    # w1 residency: keep the whole (K1p, H1p) bf16 block in VMEM if it fits in
    # ~1/3 of the budget; otherwise stream it over a K-reduction axis (tk=512).
    K1p_lane = _round_up(K1, LANE)
    if K1p_lane * H1p * 2 <= vmem_budget // 3:
        tk = K1p_lane
    else:
        tk = 512
    K1p = _round_up(K1, tk)
    nk = K1p // tk

    bf16, f32 = jnp.bfloat16, jnp.float32
    return dict(
        w1=jnp.pad(w1, ((0, K1p - K1), (0, H1p - H1))).astype(bf16),
        b1=jnp.pad(b1, ((0, 0), (0, H1p - H1))).astype(f32),
        w2=jnp.pad(w2, ((0, H1p - H1), (0, H2p - H2))).astype(bf16),
        b2=jnp.pad(b2, ((0, 0), (0, H2p - H2))).astype(f32),
        w3=jnp.pad(w3, ((0, H2p - H2), (0, Np - N))).astype(bf16),
        b3=jnp.pad(b3, ((0, 0), (0, Np - N))).astype(f32),
        input_size=K1, output_size=N,
        K1p=K1p, H1p=H1p, H2p=H2p, Np=Np, tk=tk, nk=nk,
        vmem_budget=int(vmem_budget),
    )


def _build_call(TM, Bp, tk, nk, H1p, H2p, Np, vmem_budget, single_buffer_resident):
    def resident(shape):
        if single_buffer_resident:
            return pl.BlockSpec(shape, lambda i, k: (0, 0),
                                pipeline_mode=pl.Buffered(1))
        return pl.BlockSpec(shape, lambda i, k: (0, 0))

    if nk == 1:
        w1_spec = resident((tk, H1p))                       # fully VMEM-resident
    else:
        w1_spec = pl.BlockSpec((tk, H1p), lambda i, k: (k, 0))  # streamed over K

    return pl.pallas_call(
        _mlp_kernel,
        out_shape=jax.ShapeDtypeStruct((Bp, Np), jnp.float32),
        grid=(Bp // TM, nk),
        in_specs=[
            pl.BlockSpec((TM, tk), lambda i, k: (i, k)),   # x: pipelined batch/K
            w1_spec,
            resident((1, H1p)),
            resident((H1p, H2p)),
            resident((1, H2p)),
            resident((H2p, Np)),
            resident((1, Np)),
        ],
        out_specs=pl.BlockSpec((TM, Np), lambda i, k: (i, 0)),
        scratch_shapes=[pltpu.VMEM((TM, H1p), jnp.float32)],   # h1 accumulator
        compiler_params=pltpu.CompilerParams(
            dimension_semantics=("parallel", "arbitrary"),
            vmem_limit_bytes=int(vmem_budget)),
    )


def chatbot_forward(x, prepared):
    """x: (B, input_size) f32.  prepared: output of prepare_params()."""
    K1, N = prepared["input_size"], prepared["output_size"]
    K1p, H1p, H2p, Np = (prepared[k] for k in ("K1p", "H1p", "H2p", "Np"))
    tk, nk = prepared["tk"], prepared["nk"]
    budget = prepared["vmem_budget"]

    B = x.shape[0]
    assert x.shape[1] == K1

    # --- VMEM-budget-driven batch tile ---------------------------------------
    w1_bufs = 1 if nk == 1 else 2
    fixed = (tk * H1p * 2 * w1_bufs           # w1 block(s), bf16
             + H1p * 4 + H1p * H2p * 2 + H2p * 4 + H2p * Np * 2 + Np * 4)
    per_row = 2 * tk * 4 + 2 * Np * 4 + H1p * 4   # x(2 bufs,f32) + out(2 bufs) + acc
    tm_budget = (budget - fixed) // per_row
    tm_budget = max(8, min(1024, (tm_budget // 8) * 8))

    Bp8 = _round_up(B, 8)
    n_tiles = _cdiv(Bp8, tm_budget)
    if B >= 16 and n_tiles < 2:
        n_tiles = 2          # give both v7x TensorCores a batch tile
    TM = _round_up(_cdiv(Bp8, n_tiles), 8)
    Bp = TM * n_tiles

    # --- x: avoid a padded copy when none is needed ---------------------------
    if (Bp, K1p) != (B, K1):
        xk = jnp.pad(x, ((0, Bp - B), (0, K1p - K1))).astype(jnp.bfloat16)
    else:
        xk = x               # f32 straight from HBM; cast to bf16 inside kernel

    args = (xk, prepared["w1"], prepared["b1"], prepared["w2"], prepared["b2"],
            prepared["w3"], prepared["b3"])
    try:
        out = _build_call(TM, Bp, tk, nk, H1p, H2p, Np, budget, True)(*args)
    except Exception:
        # Fallback if this jax build rejects single-buffered (Buffered(1)) specs.
        out = _build_call(TM, Bp, tk, nk, H1p, H2p, Np, budget, False)(*args)

    return out[:B, :N]


def init_params(key, input_size, output_size):
    """Mimics PyTorch's default Linear init: U(-1/sqrt(fan_in), 1/sqrt(fan_in))."""
    ks = jax.random.split(key, 6)

    def lin(kw, kb, fan_in, fan_out):
        bound = 1.0 / jnp.sqrt(jnp.float32(fan_in))
        w = jax.random.uniform(kw, (fan_in, fan_out), jnp.float32, -bound, bound)
        b = jax.random.uniform(kb, (1, fan_out), jnp.float32, -bound, bound)
        return w, b

    w1, b1 = lin(ks[0], ks[1], input_size, 128)
    w2, b2 = lin(ks[2], ks[3], 128, 64)
    w3, b3 = lin(ks[4], ks[5], 64, output_size)
    return {"w1": w1, "b1": b1, "w2": w2, "b2": b2, "w3": w3, "b3": b3}


def _ref_forward(x, params):
    """Plain-JAX reference with the same bf16-input / f32-accumulate numerics."""
    bf = lambda a: a.astype(jnp.bfloat16).astype(jnp.float32)
    h1 = jnp.maximum(bf(x) @ bf(params["w1"]) + params["b1"], 0.0)
    h2 = jnp.maximum(bf(h1) @ bf(params["w2"]) + params["b2"], 0.0)
    return bf(h2) @ bf(params["w3"]) + params["b3"]


if __name__ == "__main__":
    key = jax.random.PRNGKey(0)
    k_x, k_p = jax.random.split(key)

    batch = 8
    input_size = 32   # e.g. bag-of-words vocabulary size
    output_size = 16  # number of intent classes

    x = jax.random.normal(k_x, (batch, input_size), jnp.float32)
    params = init_params(k_p, input_size, output_size)
    prepared = prepare_params(params)   # one-time pad/cast + tiling plan

    out = chatbot_forward(x, prepared)
    out = jax.block_until_ready(out)

    ref = _ref_forward(x, params)
    assert out.shape == (batch, output_size)
    assert jnp.allclose(out, ref, atol=1e-2, rtol=1e-2), (
        float(jnp.max(jnp.abs(out - ref))))

    print("KERNEL_OK")
</pallas_src>

<mosaic_0001>
module attributes {stable_mosaic.version = 11 : i64} {
  func.func @_mlp_kernel(%arg0: i32, %arg1: i32, %arg2: memref<8x128xbf16, #tpu.memory_space<vmem>>, %arg3: memref<128x128xbf16, #tpu.memory_space<vmem>>, %arg4: memref<1x128xf32, #tpu.memory_space<vmem>>, %arg5: memref<128x128xbf16, #tpu.memory_space<vmem>>, %arg6: memref<1x128xf32, #tpu.memory_space<vmem>>, %arg7: memref<128x128xbf16, #tpu.memory_space<vmem>>, %arg8: memref<1x128xf32, #tpu.memory_space<vmem>>, %arg9: memref<8x128xf32, #tpu.memory_space<vmem>>, %arg10: memref<8x128xf32, #tpu.memory_space<vmem>>) attributes {dimension_semantics = [#tpu.dimension_semantics<parallel>, #tpu.dimension_semantics<arbitrary>], iteration_bounds = array<i64: 1, 1>, scalar_prefetch = 0 : i64, scratch_operands = 1 : i64, tpu.core_type = #tpu.core_type<tc>, window_params = [{transform_indices = @transform_0, window_bounds = array<i64: 8, 128>}, {pipeline_mode = #tpu.pipeline_mode<synchronous>, transform_indices = @transform_1, window_bounds = array<i64: 128, 128>}, {pipeline_mode = #tpu.pipeline_mode<synchronous>, transform_indices = @transform_2, window_bounds = array<i64: 1, 128>}, {pipeline_mode = #tpu.pipeline_mode<synchronous>, transform_indices = @transform_3, window_bounds = array<i64: 128, 128>}, {pipeline_mode = #tpu.pipeline_mode<synchronous>, transform_indices = @transform_4, window_bounds = array<i64: 1, 128>}, {pipeline_mode = #tpu.pipeline_mode<synchronous>, transform_indices = @transform_5, window_bounds = array<i64: 128, 128>}, {pipeline_mode = #tpu.pipeline_mode<synchronous>, transform_indices = @transform_6, window_bounds = array<i64: 1, 128>}, {transform_indices = @transform_7, window_bounds = array<i64: 8, 128>}]} {
    %c0_i32 = arith.constant 0 : i32
    %0 = arith.cmpi eq, %arg1, %c0_i32 : i32
    %1 = arith.extui %0 : i1 to i32
    %c0_i32_0 = arith.constant 0 : i32
    %2 = arith.cmpi ne, %1, %c0_i32_0 : i32
    scf.if %2 {
      %cst_10 = arith.constant 0.000000e+00 : f32
      %12 = vector.broadcast %cst_10 : f32 to vector<8x128xf32>
      %c0_11 = arith.constant 0 : index
      %c0_12 = arith.constant 0 : index
      %13 = vector.load %arg10[%c0_11, %c0_12] : memref<8x128xf32, #tpu.memory_space<vmem>>, vector<8x128xf32>
      tpu.vector_store %arg10[%c0_11, %c0_12], %12 {strides = array<i32>} : memref<8x128xf32, #tpu.memory_space<vmem>>, vector<8x128xf32>,
    } else {
    }
    %c0 = arith.constant 0 : index
    %c0_1 = arith.constant 0 : index
    %3 = vector.load %arg2[%c0, %c0_1] : memref<8x128xbf16, #tpu.memory_space<vmem>>, vector<8x128xbf16>
    %c0_2 = arith.constant 0 : index
    %c0_3 = arith.constant 0 : index
    %4 = vector.load %arg10[%c0_2, %c0_3] : memref<8x128xf32, #tpu.memory_space<vmem>>, vector<8x128xf32>
    %c0_4 = arith.constant 0 : index
    %c0_5 = arith.constant 0 : index
    %5 = vector.load %arg3[%c0_4, %c0_5] : memref<128x128xbf16, #tpu.memory_space<vmem>>, vector<128x128xbf16>
    %cst = arith.constant dense<0.000000e+00> : vector<8x128xf32>
    %6 = tpu.matmul %3, %5, %cst {dimension_numbers = #tpu.dot_dimension_numbers<[1], [0], [0], [1], [0, 0, 1, 1], [], []>} : vector<8x128xbf16>, vector<128x128xbf16>, vector<8x128xf32> -> vector<8x128xf32>
    %7 = arith.addf %4, %6 : vector<8x128xf32>
    %c0_6 = arith.constant 0 : index
    %c0_7 = arith.constant 0 : index
    %8 = vector.load %arg10[%c0_6, %c0_7] : memref<8x128xf32, #tpu.memory_space<vmem>>, vector<8x128xf32>
    tpu.vector_store %arg10[%c0_6, %c0_7], %7 {strides = array<i32>} : memref<8x128xf32, #tpu.memory_space<vmem>>, vector<8x128xf32>,
    %c0_i32_8 = arith.constant 0 : i32
    %9 = arith.cmpi eq, %arg1, %c0_i32_8 : i32
    %10 = arith.extui %9 : i1 to i32
    %c0_i32_9 = arith.constant 0 : i32
    %11 = arith.cmpi ne, %10, %c0_i32_9 : i32
    scf.if %11 {
      %c0_10 = arith.constant 0 : index
      %c0_11 = arith.constant 0 : index
      %12 = vector.load %arg10[%c0_10, %c0_11] : memref<8x128xf32, #tpu.memory_space<vmem>>, vector<8x128xf32>
      %c0_12 = arith.constant 0 : index
      %c0_13 = arith.constant 0 : index
      %13 = vector.load %arg4[%c0_12, %c0_13] : memref<1x128xf32, #tpu.memory_space<vmem>>, vector<1x128xf32>
      %14 = vector.broadcast %13 : vector<1x128xf32> to vector<8x128xf32>
      %15 = arith.addf %12, %14 : vector<8x128xf32>
      %cst_14 = arith.constant 0.000000e+00 : f32
      %16 = vector.broadcast %cst_14 : f32 to vector<8x128xf32>
      %17 = arith.maximumf %15, %16 : vector<8x128xf32>
      %18 = arith.truncf %17 : vector<8x128xf32> to vector<8x128xbf16>
      %c0_15 = arith.constant 0 : index
      %c0_16 = arith.constant 0 : index
      %19 = vector.load %arg5[%c0_15, %c0_16] : memref<128x128xbf16, #tpu.memory_space<vmem>>, vector<128x128xbf16>
      %cst_17 = arith.constant dense<0.000000e+00> : vector<8x128xf32>
      %20 = tpu.matmul %18, %19, %cst_17 {dimension_numbers = #tpu.dot_dimension_numbers<[1], [0], [0], [1], [0, 0, 1, 1], [], []>} : vector<8x128xbf16>, vector<128x128xbf16>, vector<8x128xf32> -> vector<8x128xf32>
      %c0_18 = arith.constant 0 : index
      %c0_19 = arith.constant 0 : index
      %21 = vector.load %arg6[%c0_18, %c0_19] : memref<1x128xf32, #tpu.memory_space<vmem>>, vector<1x128xf32>
      %22 = vector.broadcast %21 : vector<1x128xf32> to vector<8x128xf32>
      %23 = arith.addf %20, %22 : vector<8x128xf32>
      %cst_20 = arith.constant 0.000000e+00 : f32
      %24 = vector.broadcast %cst_20 : f32 to vector<8x128xf32>
      %25 = arith.maximumf %23, %24 : vector<8x128xf32>
      %26 = arith.truncf %25 : vector<8x128xf32> to vector<8x128xbf16>
      %c0_21 = arith.constant 0 : index
      %c0_22 = arith.constant 0 : index
      %27 = vector.load %arg7[%c0_21, %c0_22] : memref<128x128xbf16, #tpu.memory_space<vmem>>, vector<128x128xbf16>
      %cst_23 = arith.constant dense<0.000000e+00> : vector<8x128xf32>
      %28 = tpu.matmul %26, %27, %cst_23 {dimension_numbers = #tpu.dot_dimension_numbers<[1], [0], [0], [1], [0, 0, 1, 1], [], []>} : vector<8x128xbf16>, vector<128x128xbf16>, vector<8x128xf32> -> vector<8x128xf32>
      %c0_24 = arith.constant 0 : index
      %c0_25 = arith.constant 0 : index
      %29 = vector.load %arg8[%c0_24, %c0_25] : memref<1x128xf32, #tpu.memory_space<vmem>>, vector<1x128xf32>
      %30 = vector.broadcast %29 : vector<1x128xf32> to vector<8x128xf32>
      %31 = arith.addf %28, %30 : vector<8x128xf32>
      %c0_26 = arith.constant 0 : index
      %c0_27 = arith.constant 0 : index
      %32 = vector.load %arg9[%c0_26, %c0_27] : memref<8x128xf32, #tpu.memory_space<vmem>>, vector<8x128xf32>
      tpu.vector_store %arg9[%c0_26, %c0_27], %31 {strides = array<i32>} : memref<8x128xf32, #tpu.memory_space<vmem>>, vector<8x128xf32>,
    } else {
    }
    return
  }
  func.func @transform_0(%arg0: i32, %arg1: i32) -> (i32, i32) {
    %c0_i32 = arith.constant 0 : i32
    return %arg0, %arg1 : i32, i32
  }
  func.func @transform_1(%arg0: i32, %arg1: i32) -> (i32, i32) {
    %c0_i32 = arith.constant 0 : i32
    %c0_i32_0 = arith.constant 0 : i32
    %c0_i32_1 = arith.constant 0 : i32
    return %c0_i32, %c0_i32_0 : i32, i32
  }
  func.func @transform_2(%arg0: i32, %arg1: i32) -> (i32, i32) {
    %c0_i32 = arith.constant 0 : i32
    %c0_i32_0 = arith.constant 0 : i32
    %c0_i32_1 = arith.constant 0 : i32
    return %c0_i32, %c0_i32_0 : i32, i32
  }
  func.func @transform_3(%arg0: i32, %arg1: i32) -> (i32, i32) {
    %c0_i32 = arith.constant 0 : i32
    %c0_i32_0 = arith.constant 0 : i32
    %c0_i32_1 = arith.constant 0 : i32
    return %c0_i32, %c0_i32_0 : i32, i32
  }
  func.func @transform_4(%arg0: i32, %arg1: i32) -> (i32, i32) {
    %c0_i32 = arith.constant 0 : i32
    %c0_i32_0 = arith.constant 0 : i32
    %c0_i32_1 = arith.constant 0 : i32
    return %c0_i32, %c0_i32_0 : i32, i32
  }
  func.func @transform_5(%arg0: i32, %arg1: i32) -> (i32, i32) {
    %c0_i32 = arith.constant 0 : i32
    %c0_i32_0 = arith.constant 0 : i32
    %c0_i32_1 = arith.constant 0 : i32
    return %c0_i32, %c0_i32_0 : i32, i32
  }
  func.func @transform_6(%arg0: i32, %arg1: i32) -> (i32, i32) {
    %c0_i32 = arith.constant 0 : i32
    %c0_i32_0 = arith.constant 0 : i32
    %c0_i32_1 = arith.constant 0 : i32
    return %c0_i32, %c0_i32_0 : i32, i32
  }
  func.func @transform_7(%arg0: i32, %arg1: i32) -> (i32, i32) {
    %c0_i32 = arith.constant 0 : i32
    %c0_i32_0 = arith.constant 0 : i32
    return %arg0, %c0_i32 : i32, i32
  }
}

module attributes {stable_mosaic.version = 11 : i64} {
  func.func @_mlp_kernel(%arg0: i32, %arg1: i32, %arg2: memref<8x128xbf16, #tpu.memory_space<vmem>>, %arg3: memref<128x128xbf16, #tpu.memory_space<vmem>>, %arg4: memref<1x128xf32, #tpu.memory_space<vmem>>, %arg5: memref<128x128xbf16, #tpu.memory_space<vmem>>, %arg6: memref<1x128xf32, #tpu.memory_space<vmem>>, %arg7: memref<128x128xbf16, #tpu.memory_space<vmem>>, %arg8: memref<1x128xf32, #tpu.memory_space<vmem>>, %arg9: memref<8x128xf32, #tpu.memory_space<vmem>>, %arg10: memref<8x128xf32, #tpu.memory_space<vmem>>) attributes {dimension_semantics = [#tpu.dimension_semantics<parallel>, #tpu.dimension_semantics<arbitrary>], iteration_bounds = array<i64: 1, 1>, scalar_prefetch = 0 : i64, scratch_operands = 1 : i64, tpu.core_type = #tpu.core_type<tc>, window_params = [{transform_indices = @transform_0, window_bounds = array<i64: 8, 128>}, {pipeline_mode = #tpu.pipeline_mode<synchronous>, transform_indices = @transform_1, window_bounds = array<i64: 128, 128>}, {pipeline_mode = #tpu.pipeline_mode<synchronous>, transform_indices = @transform_2, window_bounds = array<i64: 1, 128>}, {pipeline_mode = #tpu.pipeline_mode<synchronous>, transform_indices = @transform_3, window_bounds = array<i64: 128, 128>}, {pipeline_mode = #tpu.pipeline_mode<synchronous>, transform_indices = @transform_4, window_bounds = array<i64: 1, 128>}, {pipeline_mode = #tpu.pipeline_mode<synchronous>, transform_indices = @transform_5, window_bounds = array<i64: 128, 128>}, {pipeline_mode = #tpu.pipeline_mode<synchronous>, transform_indices = @transform_6, window_bounds = array<i64: 1, 128>}, {transform_indices = @transform_7, window_bounds = array<i64: 8, 128>}]} {
    %c0_i32 = arith.constant 0 : i32
    %0 = arith.cmpi eq, %arg1, %c0_i32 : i32
    %1 = arith.extui %0 : i1 to i32
    %c0_i32_0 = arith.constant 0 : i32
    %2 = arith.cmpi ne, %1, %c0_i32_0 : i32
    scf.if %2 {
      %cst_10 = arith.constant 0.000000e+00 : f32
      %12 = vector.broadcast %cst_10 : f32 to vector<8x128xf32>
      %c0_11 = arith.constant 0 : index
      %c0_12 = arith.constant 0 : index
      %13 = vector.load %arg10[%c0_11, %c0_12] : memref<8x128xf32, #tpu.memory_space<vmem>>, vector<8x128xf32>
      tpu.vector_store %arg10[%c0_11, %c0_12], %12 {strides = array<i32>} : memref<8x128xf32, #tpu.memory_space<vmem>>, vector<8x128xf32>,
    } else {
    }
    %c0 = arith.constant 0 : index
    %c0_1 = arith.constant 0 : index
    %3 = vector.load %arg2[%c0, %c0_1] : memref<8x128xbf16, #tpu.memory_space<vmem>>, vector<8x128xbf16>
    %c0_2 = arith.constant 0 : index
    %c0_3 = arith.constant 0 : index
    %4 = vector.load %arg10[%c0_2, %c0_3] : memref<8x128xf32, #tpu.memory_space<vmem>>, vector<8x128xf32>
    %c0_4 = arith.constant 0 : index
    %c0_5 = arith.constant 0 : index
    %5 = vector.load %arg3[%c0_4, %c0_5] : memref<128x128xbf16, #tpu.memory_space<vmem>>, vector<128x128xbf16>
    %cst = arith.constant dense<0.000000e+00> : vector<8x128xf32>
    %6 = tpu.matmul %3, %5, %cst {dimension_numbers = #tpu.dot_dimension_numbers<[1], [0], [0], [1], [0, 0, 1, 1], [], []>} : vector<8x128xbf16>, vector<128x128xbf16>, vector<8x128xf32> -> vector<8x128xf32>
    %7 = arith.addf %4, %6 : vector<8x128xf32>
    %c0_6 = arith.constant 0 : index
    %c0_7 = arith.constant 0 : index
    %8 = vector.load %arg10[%c0_6, %c0_7] : memref<8x128xf32, #tpu.memory_space<vmem>>, vector<8x128xf32>
    tpu.vector_store %arg10[%c0_6, %c0_7], %7 {strides = array<i32>} : memref<8x128xf32, #tpu.memory_space<vmem>>, vector<8x128xf32>,
    %c0_i32_8 = arith.constant 0 : i32
    %9 = arith.cmpi eq, %arg1, %c0_i32_8 : i32
    %10 = arith.extui %9 : i1 to i32
    %c0_i32_9 = arith.constant 0 : i32
    %11 = arith.cmpi ne, %10, %c0_i32_9 : i32
    scf.if %11 {
      %c0_10 = arith.constant 0 : index
      %c0_11 = arith.constant 0 : index
      %12 = vector.load %arg10[%c0_10, %c0_11] : memref<8x128xf32, #tpu.memory_space<vmem>>, vector<8x128xf32>
      %c0_12 = arith.constant 0 : index
      %c0_13 = arith.constant 0 : index
      %13 = vector.load %arg4[%c0_12, %c0_13] : memref<1x128xf32, #tpu.memory_space<vmem>>, vector<1x128xf32>
      %14 = vector.broadcast %13 : vector<1x128xf32> to vector<8x128xf32>
      %15 = arith.addf %12, %14 : vector<8x128xf32>
      %cst_14 = arith.constant 0.000000e+00 : f32
      %16 = vector.broadcast %cst_14 : f32 to vector<8x128xf32>
      %17 = arith.maximumf %15, %16 : vector<8x128xf32>
      %18 = arith.truncf %17 : vector<8x128xf32> to vector<8x128xbf16>
      %c0_15 = arith.constant 0 : index
      %c0_16 = arith.constant 0 : index
      %19 = vector.load %arg5[%c0_15, %c0_16] : memref<128x128xbf16, #tpu.memory_space<vmem>>, vector<128x128xbf16>
      %cst_17 = arith.constant dense<0.000000e+00> : vector<8x128xf32>
      %20 = tpu.matmul %18, %19, %cst_17 {dimension_numbers = #tpu.dot_dimension_numbers<[1], [0], [0], [1], [0, 0, 1, 1], [], []>} : vector<8x128xbf16>, vector<128x128xbf16>, vector<8x128xf32> -> vector<8x128xf32>
      %c0_18 = arith.constant 0 : index
      %c0_19 = arith.constant 0 : index
      %21 = vector.load %arg6[%c0_18, %c0_19] : memref<1x128xf32, #tpu.memory_space<vmem>>, vector<1x128xf32>
      %22 = vector.broadcast %21 : vector<1x128xf32> to vector<8x128xf32>
      %23 = arith.addf %20, %22 : vector<8x128xf32>
      %cst_20 = arith.constant 0.000000e+00 : f32
      %24 = vector.broadcast %cst_20 : f32 to vector<8x128xf32>
      %25 = arith.maximumf %23, %24 : vector<8x128xf32>
      %26 = arith.truncf %25 : vector<8x128xf32> to vector<8x128xbf16>
      %c0_21 = arith.constant 0 : index
      %c0_22 = arith.constant 0 : index
      %27 = vector.load %arg7[%c0_21, %c0_22] : memref<128x128xbf16, #tpu.memory_space<vmem>>, vector<128x128xbf16>
      %cst_23 = arith.constant dense<0.000000e+00> : vector<8x128xf32>
      %28 = tpu.matmul %26, %27, %cst_23 {dimension_numbers = #tpu.dot_dimension_numbers<[1], [0], [0], [1], [0, 0, 1, 1], [], []>} : vector<8x128xbf16>, vector<128x128xbf16>, vector<8x128xf32> -> vector<8x128xf32>
      %c0_24 = arith.constant 0 : index
      %c0_25 = arith.constant 0 : index
      %29 = vector.load %arg8[%c0_24, %c0_25] : memref<1x128xf32, #tpu.memory_space<vmem>>, vector<1x128xf32>
      %30 = vector.broadcast %29 : vector<1x128xf32> to vector<8x128xf32>
      %31 = arith.addf %28, %30 : vector<8x128xf32>
      %c0_26 = arith.constant 0 : index
      %c0_27 = arith.constant 0 : index
      %32 = vector.load %arg9[%c0_26, %c0_27] : memref<8x128xf32, #tpu.memory_space<vmem>>, vector<8x128xf32>
      tpu.vector_store %arg9[%c0_26, %c0_27], %31 {strides = array<i32>} : memref<8x128xf32, #tpu.memory_space<vmem>>, vector<8x128xf32>,
    } else {
    }
    return
  }
  func.func @transform_0(%arg0: i32, %arg1: i32) -> (i32, i32) {
    %c0_i32 = arith.constant 0 : i32
    return %arg0, %arg1 : i32, i32
  }
  func.func @transform_1(%arg0: i32, %arg1: i32) -> (i32, i32) {
    %c0_i32 = arith.constant 0 : i32
    %c0_i32_0 = arith.constant 0 : i32
    %c0_i32_1 = arith.constant 0 : i32
    return %c0_i32, %c0_i32_0 : i32, i32
  }
  func.func @transform_2(%arg0: i32, %arg1: i32) -> (i32, i32) {
    %c0_i32 = arith.constant 0 : i32
    %c0_i32_0 = arith.constant 0 : i32
    %c0_i32_1 = arith.constant 0 : i32
    return %c0_i32, %c0_i32_0 : i32, i32
  }
  func.func @transform_3(%arg0: i32, %arg1: i32) -> (i32, i32) {
    %c0_i32 = arith.constant 0 : i32
    %c0_i32_0 = arith.constant 0 : i32
    %c0_i32_1 = arith.constant 0 : i32
    return %c0_i32, %c0_i32_0 : i32, i32
  }
  func.func @transform_4(%arg0: i32, %arg1: i32) -> (i32, i32) {
    %c0_i32 = arith.constant 0 : i32
    %c0_i32_0 = arith.constant 0 : i32
    %c0_i32_1 = arith.constant 0 : i32
    return %c0_i32, %c0_i32_0 : i32, i32
  }
  func.func @transform_5(%arg0: i32, %arg1: i32) -> (i32, i32) {
    %c0_i32 = arith.constant 0 : i32
    %c0_i32_0 = arith.constant 0 : i32
    %c0_i32_1 = arith.constant 0 : i32
    return %c0_i32, %c0_i32_0 : i32, i32
  }
  func.func @transform_6(%arg0: i32, %arg1: i32) -> (i32, i32) {
    %c0_i32 = arith.constant 0 : i32
    %c0_i32_0 = arith.constant 0 : i32
    %c0_i32_1 = arith.constant 0 : i32
    return %c0_i32, %c0_i32_0 : i32, i32
  }
  func.func @transform_7(%arg0: i32, %arg1: i32) -> (i32, i32) {
    %c0_i32 = arith.constant 0 : i32
    %c0_i32_0 = arith.constant 0 : i32
    return %arg0, %c0_i32 : i32, i32
  }
}

</mosaic_0001>

<llo_original>
// kernel: tpu_custom_call.1
$region0: #{tpu_custom_call.1}
  #allocation0 [shape = 'u32[]', space=smem, size = 0x4, offset = 0x4, fixed_abs, tag = 'smem constant byte address 0x4 - core index']
  #allocation1 [shape = 'u32[144,128]{1,0:T(1,128)}', space=vmem, size = 0x12000, scoped, tag = 'internal scratch']
  #allocation2 [shape = 'f32[8,128]{1,0:T(8,128)}', space=vmem, size = 0x1000, scoped, tag = 'scratch operand']
  %s0 = inlined_call_operand.hbm [shape: bf16[8,128], index: 0, kind: input, shape index: {}]
  %s1 = inlined_call_operand.hbm [shape: bf16[128,128], index: 1, kind: input, shape index: {}]
  %s2 = inlined_call_operand.vmem [shape: f32[1,128], index: 2, kind: input, shape index: {}]
  %s3 = inlined_call_operand.hbm [shape: bf16[128,128], index: 3, kind: input, shape index: {}]
  %s4 = inlined_call_operand.vmem [shape: f32[1,128], index: 4, kind: input, shape index: {}]
  %s5 = inlined_call_operand.hbm [shape: bf16[128,128], index: 5, kind: input, shape index: {}]
  %s6 = inlined_call_operand.vmem [shape: f32[1,128], index: 6, kind: input, shape index: {}]
  %s7 = inlined_call_operand.hbm [shape: f32[8,128], index: 7, kind: output, shape index: {}]
  %s8 = sld [smem:[#allocation0]]
  $region62: #{tpu_custom_call.1} parent=0
    _
  %s10 = ssub.s32 1, %s8
  %s11 = scalar_select 0, %s10, %s8
  $region1: #{tpu_custom_call.1} parent=0
    #allocation3 [shape = 'u8[2048]{0}', space=vmem, size = 0x800, scoped, tag = 'input window, operand 0, single buffered']
    #allocation4 [shape = 's32[1]{0}', space=sflag, size = 0x4, scoped, tag = 'scoped memory for tpu_custom_call.1']
    #allocation5 [shape = 's32[1]{0}', space=sflag, size = 0x4, scoped, tag = 'scoped memory for tpu_custom_call.1']
    #allocation6 [shape = 'u8[32768]{0}', space=vmem, size = 0x8000, scoped, tag = 'input window, operand 1, single buffered']
    #allocation7 [shape = 's32[1]{0}', space=sflag, size = 0x4, scoped, tag = 'scoped memory for tpu_custom_call.1']
    #allocation8 [shape = 'u8[32768]{0}', space=vmem, size = 0x8000, scoped, tag = 'input window, operand 3, single buffered']
    #allocation9 [shape = 'u8[32768]{0}', space=vmem, size = 0x8000, scoped, tag = 'input window, operand 5, single buffered']
    #allocation10 [shape = 's32[1]{0}', space=sflag, size = 0x4, scoped, tag = 'scoped memory for tpu_custom_call.1']
    #allocation11 [shape = 'u8[4096]{0}', space=vmem, size = 0x1000, scoped, tag = 'output window, operand 0, single buffered']
    %12 = vsyncpa [#allocation4], 0
    %13 = vsyncpa [#allocation7], 0
    %14 = vsyncpa [#allocation10], 0
    %15 = vsyncpa [#allocation5], 0
    // Predicated region
    $region2: #{tpu_custom_call.1} parent=1 // pred_check
      _
    $region3: #{tpu_custom_call.1} parent=1 // pred_check_branch
      %17 = sbr.rel (0) target = $region5
    $region4: #{tpu_custom_call.1} parent=1 // pred_region
      %s19 = ssub.s32 64, 64
      %20 = vsyncadd [#allocation4], %s19
      %s22 = sshll.u32 [#allocation3], 4
      %s23 = int_to_ptr.vmem [resolvable:$true] %s22
      %25 = dma.hbm_to_vmem [thread:$0]  %s0, 64, %s23, [#allocation4]
    $region5: #{tpu_custom_call.1} parent=1 // pred_fallthru
      _
    // Predicated region
    $region6: #{tpu_custom_call.1} parent=1 // pred_check
      _
    $region7: #{tpu_custom_call.1} parent=1 // pred_check_branch
      %27 = sbr.rel (0) target = $region9
    $region8: #{tpu_custom_call.1} parent=1 // pred_region
      %s29 = ssub.s32 1024, 1024
      %30 = vsyncadd [#allocation7], %s29
      %s31 = sshll.u32 [#allocation6], 4
      %s32 = int_to_ptr.vmem [resolvable:$true] %s31
      %37 = dma.hbm_to_vmem [thread:$0]  %s1, 1024, %s32, [#allocation7], 64, 64, 4
    $region9: #{tpu_custom_call.1} parent=1 // pred_fallthru
      _
    // Predicated region
    $region10: #{tpu_custom_call.1} parent=1 // pred_check
      _
    $region11: #{tpu_custom_call.1} parent=1 // pred_check_branch
      %39 = sbr.rel (0) target = $region13
    $region12: #{tpu_custom_call.1} parent=1 // pred_region
      _
    $region13: #{tpu_custom_call.1} parent=1 // pred_fallthru
      _
    // Predicated region
    $region14: #{tpu_custom_call.1} parent=1 // pred_check
      _
    $region15: #{tpu_custom_call.1} parent=1 // pred_check_branch
      %41 = sbr.rel (0) target = $region17
    $region16: #{tpu_custom_call.1} parent=1 // pred_region
      %s43 = ssub.s32 1024, 1024
      %44 = vsyncadd [#allocation7], %s43
      %s45 = sshll.u32 [#allocation8], 4
      %s46 = int_to_ptr.vmem [resolvable:$true] %s45
      %51 = dma.hbm_to_vmem [thread:$0]  %s3, 1024, %s46, [#allocation7], 64, 64, 4
    $region17: #{tpu_custom_call.1} parent=1 // pred_fallthru
      _
    // Predicated region
    $region18: #{tpu_custom_call.1} parent=1 // pred_check
      _
    $region19: #{tpu_custom_call.1} parent=1 // pred_check_branch
      %53 = sbr.rel (0) target = $region21
    $region20: #{tpu_custom_call.1} parent=1 // pred_region
      _
    $region21: #{tpu_custom_call.1} parent=1 // pred_fallthru
      _
    // Predicated region
    $region22: #{tpu_custom_call.1} parent=1 // pred_check
      _
    $region23: #{tpu_custom_call.1} parent=1 // pred_check_branch
      %55 = sbr.rel (0) target = $region25
    $region24: #{tpu_custom_call.1} parent=1 // pred_region
      %s57 = ssub.s32 1024, 1024
      %58 = vsyncadd [#allocation10], %s57
      %s59 = sshll.u32 [#allocation9], 4
      %s60 = int_to_ptr.vmem [resolvable:$true] %s59
      %65 = dma.hbm_to_vmem [thread:$0]  %s5, 1024, %s60, [#allocation10], 64, 64, 4
    $region25: #{tpu_custom_call.1} parent=1 // pred_fallthru
      _
    // Predicated region
    $region26: #{tpu_custom_call.1} parent=1 // pred_check
      _
    $region27: #{tpu_custom_call.1} parent=1 // pred_check_branch
      %67 = sbr.rel (0) target = $region29
    $region28: #{tpu_custom_call.1} parent=1 // pred_region
      _
    $region29: #{tpu_custom_call.1} parent=1 // pred_fallthru
      _
    // Predicated region
    $region30: #{tpu_custom_call.1} parent=1 // pred_check
      _
    $region31: #{tpu_custom_call.1} parent=1 // pred_check_branch
      %69 = sbr.rel (0) target = $region33
    $region32: #{tpu_custom_call.1} parent=1 // pred_region
      %70 = dma.done [#allocation4], 64
    $region33: #{tpu_custom_call.1} parent=1 // pred_fallthru
      _
    // Predicated region
    $region34: #{tpu_custom_call.1} parent=1 // pred_check
      _
    $region35: #{tpu_custom_call.1} parent=1 // pred_check_branch
      %72 = sbr.rel (0) target = $region37
    $region36: #{tpu_custom_call.1} parent=1 // pred_region
      %73 = dma.done [#allocation7], 1024
    $region37: #{tpu_custom_call.1} parent=1 // pred_fallthru
      _
    // Predicated region
    $region38: #{tpu_custom_call.1} parent=1 // pred_check
      _
    $region39: #{tpu_custom_call.1} parent=1 // pred_check_branch
      %75 = sbr.rel (0) target = $region41
    $region40: #{tpu_custom_call.1} parent=1 // pred_region
      %76 = dma.done [#allocation7], 1024
    $region41: #{tpu_custom_call.1} parent=1 // pred_fallthru
      _
    // Predicated region
    $region42: #{tpu_custom_call.1} parent=1 // pred_check
      _
    $region43: #{tpu_custom_call.1} parent=1 // pred_check_branch
      %78 = sbr.rel (0) target = $region45
    $region44: #{tpu_custom_call.1} parent=1 // pred_region
      %79 = dma.done [#allocation10], 1024
    $region45: #{tpu_custom_call.1} parent=1 // pred_fallthru
      _
    %p81 = scmp.eq.s32.totalorder 0, 0
    // Predicated region
    $region46: #{tpu_custom_call.1} parent=1 // pred_check
      %p82 = pneg %p81
    $region47: #{tpu_custom_call.1} parent=1 // pred_check_branch
      %84 = sbr.rel (%p82) target = $region49
    $region48: #{tpu_custom_call.1} parent=1 // pred_region
      %85 = vst [vmem:[#allocation2] sm:$0xff] 0.0
    $region49: #{tpu_custom_call.1} parent=1 // pred_fallthru
      _
    %v86 = vld [vmem:[#allocation3] sm:$0xf]
    %v87 = vld [vmem:[#allocation2] sm:$0xff]
    %v88 = vld [vmem:[#allocation6] sm:$0xf]
    %v89 = vld [vmem:[#allocation6 + $0x4] sm:$0xf]
    %v90 = vld [vmem:[#allocation6 + $0x8] sm:$0xf]
    %v91 = vld [vmem:[#allocation6 + $0xc] sm:$0xf]
    %v92 = vld [vmem:[#allocation6 + $0x10] sm:$0xf]
    %v93 = vld [vmem:[#allocation6 + $0x14] sm:$0xf]
    %v94 = vld [vmem:[#allocation6 + $0x18] sm:$0xf]
    %v95 = vld [vmem:[#allocation6 + $0x1c] sm:$0xf]
    %v96 = vld [vmem:[#allocation6 + $0x20] sm:$0xf]
    %v97 = vld [vmem:[#allocation6 + $0x24] sm:$0xf]
    %v98 = vld [vmem:[#allocation6 + $0x28] sm:$0xf]
    %v99 = vld [vmem:[#allocation6 + $0x2c] sm:$0xf]
    %v100 = vld [vmem:[#allocation6 + $0x30] sm:$0xf]
    %v101 = vld [vmem:[#allocation6 + $0x34] sm:$0xf]
    %v102 = vld [vmem:[#allocation6 + $0x38] sm:$0xf]
    %v103 = vld [vmem:[#allocation6 + $0x3c] sm:$0xf]
    %v120 = vunpack.c.l.b16 %v88
    %v121 = vunpack.c.l.b16 %v89
    %v122 = vunpack.c.l.b16 %v90
    %v123 = vunpack.c.l.b16 %v91
    %v124 = vunpack.c.l.b16 %v92
    %v125 = vunpack.c.l.b16 %v93
    %v126 = vunpack.c.l.b16 %v94
    %v127 = vunpack.c.l.b16 %v95
    %v128 = vunpack.c.l.b16 %v96
    %v129 = vunpack.c.l.b16 %v97
    %v130 = vunpack.c.l.b16 %v98
    %v131 = vunpack.c.l.b16 %v99
    %v132 = vunpack.c.l.b16 %v100
    %v133 = vunpack.c.l.b16 %v101
    %v134 = vunpack.c.l.b16 %v102
    %v135 = vunpack.c.l.b16 %v103
    %v136 = vpack.c.b16 %v121, %v120
    %v137 = vpack.c.b16 %v123, %v122
    %v138 = vpack.c.b16 %v125, %v124
    %v139 = vpack.c.b16 %v127, %v126
    %v140 = vpack.c.b16 %v129, %v128
    %v141 = vpack.c.b16 %v131, %v130
    %v142 = vpack.c.b16 %v133, %v132
    %v143 = vpack.c.b16 %v135, %v134
    %152 = vmatprep.subr.bf16.mxu0 0
    %153 = vmatpush1.bf16.msra.mxu0 %v136
    %154 = vmatprep.subr.bf16.mxu0 0
    %155 = vmatpush1.bf16.msra.mxu0 %v137
    %156 = vmatprep.subr.bf16.mxu0 0
    %157 = vmatpush1.bf16.msra.mxu0 %v138
    %158 = vmatprep.subr.bf16.mxu0 0
    %159 = vmatpush1.bf16.msra.mxu0 %v139
    %160 = vmatprep.subr.bf16.mxu0 0
    %161 = vmatpush1.bf16.msra.mxu0 %v140
    %162 = vmatprep.subr.bf16.mxu0 0
    %163 = vmatpush1.bf16.msra.mxu0 %v141
    %164 = vmatprep.subr.bf16.mxu0 0
    %165 = vmatpush1.bf16.msra.mxu0 %v142
    %166 = vmatprep.subr.bf16.mxu0 0
    %167 = vmatpush1.bf16.msra.mxu0 %v143
    %168 = vmatprep.subr.bf16.mxu0 0
    %169 = vmatpush1.bf16.msra.mxu0 0
    %170 = vmatprep.subr.bf16.mxu0 0
    %171 = vmatpush1.bf16.msra.mxu0 0
    %172 = vmatprep.subr.bf16.mxu0 0
    %173 = vmatpush1.bf16.msra.mxu0 0
    %174 = vmatprep.subr.bf16.mxu0 0
    %175 = vmatpush1.bf16.msra.mxu0 0
    %176 = vmatprep.subr.bf16.mxu0 0
    %177 = vmatpush1.bf16.msra.mxu0 0
    %178 = vmatprep.subr.bf16.mxu0 0
    %179 = vmatpush1.bf16.msra.mxu0 0
    %180 = vmatprep.subr.bf16.mxu0 0
    %181 = vmatpush1.bf16.msra.mxu0 0
    %182 = vmatprep.subr.bf16.mxu0 0
    %183 = vmatpush1.bf16.msra.mxu0 0
    %184 = vmatprep.mubr.bf16.mxu0 0
    %185 = vmatmul.mubr.bf16.gmra.mrb[0].mxu0 %v86
    %v186 = vpop.f32.mrb[0].mxu0
    %v187 = vadd.f32 0.0, %v186
    %v188 = vpop.f32.mrb[0].mxu0
    %v189 = vpop.f32.mrb[0].mxu0
    %v190 = vpop.f32.mrb[0].mxu0
    %191 = vdwg.mxu0
    %v192 = vadd.f32 %v87, %v187
    %193 = vst [vmem:[#allocation2] sm:$0xff] %v192
    // Predicated region
    $region50: #{tpu_custom_call.1} parent=1 // pred_check
      %p194 = pneg %p81
    $region51: #{tpu_custom_call.1} parent=1 // pred_check_branch
      %196 = sbr.rel (%p194) target = $region53
    $region52: #{tpu_custom_call.1} parent=1 // pred_region
      %v197 = vld [vmem:[#allocation2] sm:$0xff]
      %v198 = vld [vmem:[%s2] sm:$0x1]
      %v200 = vlaneseq
      %v201 = vshrl.u32 %v200, 7
      %v202 = vsub.s32 0, %v201
      %v203 = vrot.slane %v198, %v202
      %v205 = vadd.f32 %v197, %v203
      %v206 = vmax.f32 %v205, 0.0
      %v207 = vpack.c.bf16 %v206, %v206
      %v208 = vld [vmem:[#allocation8] sm:$0xf]
      %v209 = vld [vmem:[#allocation8 + $0x4] sm:$0xf]
      %v210 = vld [vmem:[#allocation8 + $0x8] sm:$0xf]
      %v211 = vld [vmem:[#allocation8 + $0xc] sm:$0xf]
      %v212 = vld [vmem:[#allocation8 + $0x10] sm:$0xf]
      %v213 = vld [vmem:[#allocation8 + $0x14] sm:$0xf]
      %v214 = vld [vmem:[#allocation8 + $0x18] sm:$0xf]
      %v215 = vld [vmem:[#allocation8 + $0x1c] sm:$0xf]
      %v216 = vld [vmem:[#allocation8 + $0x20] sm:$0xf]
      %v217 = vld [vmem:[#allocation8 + $0x24] sm:$0xf]
      %v218 = vld [vmem:[#allocation8 + $0x28] sm:$0xf]
      %v219 = vld [vmem:[#allocation8 + $0x2c] sm:$0xf]
      %v220 = vld [vmem:[#allocation8 + $0x30] sm:$0xf]
      %v221 = vld [vmem:[#allocation8 + $0x34] sm:$0xf]
      %v222 = vld [vmem:[#allocation8 + $0x38] sm:$0xf]
      %v223 = vld [vmem:[#allocation8 + $0x3c] sm:$0xf]
      %v224 = vld [vmem:[%s4] sm:$0x1]
      %v226 = vlaneseq
      %v227 = vshrl.u32 %v226, 7
      %v228 = vsub.s32 0, %v227
      %v229 = vrot.slane %v224, %v228
      %v247 = vunpack.c.l.b16 %v208
      %v248 = vunpack.c.l.b16 %v209
      %v249 = vunpack.c.l.b16 %v210
      %v250 = vunpack.c.l.b16 %v211
      %v251 = vunpack.c.l.b16 %v212
      %v252 = vunpack.c.l.b16 %v213
      %v253 = vunpack.c.l.b16 %v214
      %v254 = vunpack.c.l.b16 %v215
      %v255 = vunpack.c.l.b16 %v216
      %v256 = vunpack.c.l.b16 %v217
      %v257 = vunpack.c.l.b16 %v218
      %v258 = vunpack.c.l.b16 %v219
      %v259 = vunpack.c.l.b16 %v220
      %v260 = vunpack.c.l.b16 %v221
      %v261 = vunpack.c.l.b16 %v222
      %v262 = vunpack.c.l.b16 %v223
      %v263 = vpack.c.b16 %v248, %v247
      %v264 = vpack.c.b16 %v250, %v249
      %v265 = vpack.c.b16 %v252, %v251
      %v266 = vpack.c.b16 %v254, %v253
      %v267 = vpack.c.b16 %v256, %v255
      %v268 = vpack.c.b16 %v258, %v257
      %v269 = vpack.c.b16 %v260, %v259
      %v270 = vpack.c.b16 %v262, %v261
      %279 = vmatprep.subr.bf16.mxu0 0
      %280 = vmatpush1.bf16.msra.mxu0 %v263
      %281 = vmatprep.subr.bf16.mxu0 0
      %282 = vmatpush1.bf16.msra.mxu0 %v264
      %283 = vmatprep.subr.bf16.mxu0 0
      %284 = vmatpush1.bf16.msra.mxu0 %v265
      %285 = vmatprep.subr.bf16.mxu0 0
      %286 = vmatpush1.bf16.msra.mxu0 %v266
      %287 = vmatprep.subr.bf16.mxu0 0
      %288 = vmatpush1.bf16.msra.mxu0 %v267
      %289 = vmatprep.subr.bf16.mxu0 0
      %290 = vmatpush1.bf16.msra.mxu0 %v268
      %291 = vmatprep.subr.bf16.mxu0 0
      %292 = vmatpush1.bf16.msra.mxu0 %v269
      %293 = vmatprep.subr.bf16.mxu0 0
      %294 = vmatpush1.bf16.msra.mxu0 %v270
      %295 = vmatprep.subr.bf16.mxu0 0
      %296 = vmatpush1.bf16.msra.mxu0 0
      %297 = vmatprep.subr.bf16.mxu0 0
      %298 = vmatpush1.bf16.msra.mxu0 0
      %299 = vmatprep.subr.bf16.mxu0 0
      %300 = vmatpush1.bf16.msra.mxu0 0
      %301 = vmatprep.subr.bf16.mxu0 0
      %302 = vmatpush1.bf16.msra.mxu0 0
      %303 = vmatprep.subr.bf16.mxu0 0
      %304 = vmatpush1.bf16.msra.mxu0 0
      %305 = vmatprep.subr.bf16.mxu0 0
      %306 = vmatpush1.bf16.msra.mxu0 0
      %307 = vmatprep.subr.bf16.mxu0 0
      %308 = vmatpush1.bf16.msra.mxu0 0
      %309 = vmatprep.subr.bf16.mxu0 0
      %310 = vmatpush1.bf16.msra.mxu0 0
      %311 = vmatprep.mubr.bf16.mxu0 0
      %312 = vmatmul.mubr.bf16.gmra.mrb[0].mxu0 %v207
      %v313 = vpop.f32.mrb[0].mxu0
      %v314 = vadd.f32 %v229, %v313
      %v315 = vpop.f32.mrb[0].mxu0
      %v316 = vpop.f32.mrb[0].mxu0
      %v317 = vpop.f32.mrb[0].mxu0
      %318 = vdwg.mxu0
      %v319 = vmax.f32 %v314, 0.0
      %v320 = vpack.c.bf16 %v319, %v319
      %v321 = vld [vmem:[#allocation9] sm:$0xf]
      %v322 = vld [vmem:[#allocation9 + $0x4] sm:$0xf]
      %v323 = vld [vmem:[#allocation9 + $0x8] sm:$0xf]
      %v324 = vld [vmem:[#allocation9 + $0xc] sm:$0xf]
      %v325 = vld [vmem:[#allocation9 + $0x10] sm:$0xf]
      %v326 = vld [vmem:[#allocation9 + $0x14] sm:$0xf]
      %v327 = vld [vmem:[#allocation9 + $0x18] sm:$0xf]
      %v328 = vld [vmem:[#allocation9 + $0x1c] sm:$0xf]
      %v329 = vld [vmem:[#allocation9 + $0x20] sm:$0xf]
      %v330 = vld [vmem:[#allocation9 + $0x24] sm:$0xf]
      %v331 = vld [vmem:[#allocation9 + $0x28] sm:$0xf]
      %v332 = vld [vmem:[#allocation9 + $0x2c] sm:$0xf]
      %v333 = vld [vmem:[#allocation9 + $0x30] sm:$0xf]
      %v334 = vld [vmem:[#allocation9 + $0x34] sm:$0xf]
      %v335 = vld [vmem:[#allocation9 + $0x38] sm:$0xf]
      %v336 = vld [vmem:[#allocation9 + $0x3c] sm:$0xf]
      %v337 = vld [vmem:[%s6] sm:$0x1]
      %v339 = vlaneseq
      %v340 = vshrl.u32 %v339, 7
      %v341 = vsub.s32 0, %v340
      %v342 = vrot.slane %v337, %v341
      %v360 = vunpack.c.l.b16 %v321
      %v361 = vunpack.c.l.b16 %v322
      %v362 = vunpack.c.l.b16 %v323
      %v363 = vunpack.c.l.b16 %v324
      %v364 = vunpack.c.l.b16 %v325
      %v365 = vunpack.c.l.b16 %v326
      %v366 = vunpack.c.l.b16 %v327
      %v367 = vunpack.c.l.b16 %v328
      %v368 = vunpack.c.l.b16 %v329
      %v369 = vunpack.c.l.b16 %v330
      %v370 = vunpack.c.l.b16 %v331
      %v371 = vunpack.c.l.b16 %v332
      %v372 = vunpack.c.l.b16 %v333
      %v373 = vunpack.c.l.b16 %v334
      %v374 = vunpack.c.l.b16 %v335
      %v375 = vunpack.c.l.b16 %v336
      %v376 = vpack.c.b16 %v361, %v360
      %v377 = vpack.c.b16 %v363, %v362
      %v378 = vpack.c.b16 %v365, %v364
      %v379 = vpack.c.b16 %v367, %v366
      %v380 = vpack.c.b16 %v369, %v368
      %v381 = vpack.c.b16 %v371, %v370
      %v382 = vpack.c.b16 %v373, %v372
      %v383 = vpack.c.b16 %v375, %v374
      %392 = vmatprep.subr.bf16.mxu0 0
      %393 = vmatpush1.bf16.msra.mxu0 %v376
      %394 = vmatprep.subr.bf16.mxu0 0
      %395 = vmatpush1.bf16.msra.mxu0 %v377
      %396 = vmatprep.subr.bf16.mxu0 0
      %397 = vmatpush1.bf16.msra.mxu0 %v378
      %398 = vmatprep.subr.bf16.mxu0 0
      %399 = vmatpush1.bf16.msra.mxu0 %v379
      %400 = vmatprep.subr.bf16.mxu0 0
      %401 = vmatpush1.bf16.msra.mxu0 %v380
      %402 = vmatprep.subr.bf16.mxu0 0
      %403 = vmatpush1.bf16.msra.mxu0 %v381
      %404 = vmatprep.subr.bf16.mxu0 0
      %405 = vmatpush1.bf16.msra.mxu0 %v382
      %406 = vmatprep.subr.bf16.mxu0 0
      %407 = vmatpush1.bf16.msra.mxu0 %v383
      %408 = vmatprep.subr.bf16.mxu0 0
      %409 = vmatpush1.bf16.msra.mxu0 0
      %410 = vmatprep.subr.bf16.mxu0 0
      %411 = vmatpush1.bf16.msra.mxu0 0
      %412 = vmatprep.subr.bf16.mxu0 0
      %413 = vmatpush1.bf16.msra.mxu0 0
      %414 = vmatprep.subr.bf16.mxu0 0
      %415 = vmatpush1.bf16.msra.mxu0 0
      %416 = vmatprep.subr.bf16.mxu0 0
      %417 = vmatpush1.bf16.msra.mxu0 0
      %418 = vmatprep.subr.bf16.mxu0 0
      %419 = vmatpush1.bf16.msra.mxu0 0
      %420 = vmatprep.subr.bf16.mxu0 0
      %421 = vmatpush1.bf16.msra.mxu0 0
      %422 = vmatprep.subr.bf16.mxu0 0
      %423 = vmatpush1.bf16.msra.mxu0 0
      %424 = vmatprep.mubr.bf16.mxu0 0
      %425 = vmatmul.mubr.bf16.gmra.mrb[0].mxu0 %v320
      %v426 = vpop.f32.mrb[0].mxu0
      %v427 = vadd.f32 %v342, %v426
      %v428 = vpop.f32.mrb[0].mxu0
      %v429 = vpop.f32.mrb[0].mxu0
      %v430 = vpop.f32.mrb[0].mxu0
      %431 = vdwg.mxu0
      %432 = vst [vmem:[#allocation11] sm:$0xff] %v427
    $region53: #{tpu_custom_call.1} parent=1 // pred_fallthru
      _
    // Predicated region
    $region54: #{tpu_custom_call.1} parent=1 // pred_check
      _
    $region55: #{tpu_custom_call.1} parent=1 // pred_check_branch
      %434 = sbr.rel (0) target = $region57
    $region56: #{tpu_custom_call.1} parent=1 // pred_region
      %s436 = ssub.s32 128, 128
      %437 = vsyncadd [#allocation5], %s436
      %s439 = sshll.u32 [#allocation11], 4
      %s440 = int_to_ptr.vmem [resolvable:$true] %s439
      %442 = dma.vmem_to_hbm [thread:$0]  %s440, 128, %s7, [#allocation5]
    $region57: #{tpu_custom_call.1} parent=1 // pred_fallthru
      _
    // Predicated region
    $region58: #{tpu_custom_call.1} parent=1 // pred_check
      _
    $region59: #{tpu_custom_call.1} parent=1 // pred_check_branch
      %444 = sbr.rel (0) target = $region61
    $region60: #{tpu_custom_call.1} parent=1 // pred_region
      %445 = dma.done [#allocation5], 128
    $region61: #{tpu_custom_call.1} parent=1 // pred_fallthru
      _
    %446 = vsyncpa [#allocation4], 1
    %447 = vsyncpa [#allocation7], 1
    %448 = vsyncpa [#allocation10], 1
    %449 = vsyncpa [#allocation5], 1

// kernel: tpu_custom_call.1
$region0: #{tpu_custom_call.1}
  #allocation0 [shape = 'u32[]', space=smem, size = 0x4, offset = 0x4, fixed_abs, tag = 'smem constant byte address 0x4 - core index']
  #allocation1 [shape = 'u32[144,128]{1,0:T(1,128)}', space=vmem, size = 0x12000, scoped, tag = 'internal scratch']
  #allocation2 [shape = 'f32[8,128]{1,0:T(8,128)}', space=vmem, size = 0x1000, scoped, tag = 'scratch operand']
  %s0 = inlined_call_operand.hbm [shape: bf16[8,128], index: 0, kind: input, shape index: {}]
  %s1 = inlined_call_operand.hbm [shape: bf16[128,128], index: 1, kind: input, shape index: {}]
  %s2 = inlined_call_operand.vmem [shape: f32[1,128], index: 2, kind: input, shape index: {}]
  %s3 = inlined_call_operand.hbm [shape: bf16[128,128], index: 3, kind: input, shape index: {}]
  %s4 = inlined_call_operand.vmem [shape: f32[1,128], index: 4, kind: input, shape index: {}]
  %s5 = inlined_call_operand.hbm [shape: bf16[128,128], index: 5, kind: input, shape index: {}]
  %s6 = inlined_call_operand.vmem [shape: f32[1,128], index: 6, kind: input, shape index: {}]
  %s7 = inlined_call_operand.hbm [shape: f32[8,128], index: 7, kind: output, shape index: {}]
  %s8 = sld [smem:[#allocation0]]
  $region62: #{tpu_custom_call.1} parent=0
    _
  %s10 = ssub.s32 1, %s8
  %s11 = scalar_select 0, %s10, %s8
  $region1: #{tpu_custom_call.1} parent=0
    #allocation3 [shape = 'u8[2048]{0}', space=vmem, size = 0x800, scoped, tag = 'input window, operand 0, single buffered']
    #allocation4 [shape = 's32[1]{0}', space=sflag, size = 0x4, scoped, tag = 'scoped memory for tpu_custom_call.1']
    #allocation5 [shape = 's32[1]{0}', space=sflag, size = 0x4, scoped, tag = 'scoped memory for tpu_custom_call.1']
    #allocation6 [shape = 'u8[32768]{0}', space=vmem, size = 0x8000, scoped, tag = 'input window, operand 1, single buffered']
    #allocation7 [shape = 's32[1]{0}', space=sflag, size = 0x4, scoped, tag = 'scoped memory for tpu_custom_call.1']
    #allocation8 [shape = 'u8[32768]{0}', space=vmem, size = 0x8000, scoped, tag = 'input window, operand 3, single buffered']
    #allocation9 [shape = 'u8[32768]{0}', space=vmem, size = 0x8000, scoped, tag = 'input window, operand 5, single buffered']
    #allocation10 [shape = 's32[1]{0}', space=sflag, size = 0x4, scoped, tag = 'scoped memory for tpu_custom_call.1']
    #allocation11 [shape = 'u8[4096]{0}', space=vmem, size = 0x1000, scoped, tag = 'output window, operand 0, single buffered']
    %12 = vsyncpa [#allocation4], 0
    %13 = vsyncpa [#allocation7], 0
    %14 = vsyncpa [#allocation10], 0
    %15 = vsyncpa [#allocation5], 0
    // Predicated region
    $region2: #{tpu_custom_call.1} parent=1 // pred_check
      _
    $region3: #{tpu_custom_call.1} parent=1 // pred_check_branch
      %17 = sbr.rel (0) target = $region5
    $region4: #{tpu_custom_call.1} parent=1 // pred_region
      %s19 = ssub.s32 64, 64
      %20 = vsyncadd [#allocation4], %s19
      %s22 = sshll.u32 [#allocation3], 4
      %s23 = int_to_ptr.vmem [resolvable:$true] %s22
      %25 = dma.hbm_to_vmem [thread:$0]  %s0, 64, %s23, [#allocation4]
    $region5: #{tpu_custom_call.1} parent=1 // pred_fallthru
      _
    // Predicated region
    $region6: #{tpu_custom_call.1} parent=1 // pred_check
      _
    $region7: #{tpu_custom_call.1} parent=1 // pred_check_branch
      %27 = sbr.rel (0) target = $region9
    $region8: #{tpu_custom_call.1} parent=1 // pred_region
      %s29 = ssub.s32 1024, 1024
      %30 = vsyncadd [#allocation7], %s29
      %s31 = sshll.u32 [#allocation6], 4
      %s32 = int_to_ptr.vmem [resolvable:$true] %s31
      %37 = dma.hbm_to_vmem [thread:$0]  %s1, 1024, %s32, [#allocation7], 64, 64, 4
    $region9: #{tpu_custom_call.1} parent=1 // pred_fallthru
      _
    // Predicated region
    $region10: #{tpu_custom_call.1} parent=1 // pred_check
      _
    $region11: #{tpu_custom_call.1} parent=1 // pred_check_branch
      %39 = sbr.rel (0) target = $region13
    $region12: #{tpu_custom_call.1} parent=1 // pred_region
      _
    $region13: #{tpu_custom_call.1} parent=1 // pred_fallthru
      _
    // Predicated region
    $region14: #{tpu_custom_call.1} parent=1 // pred_check
      _
    $region15: #{tpu_custom_call.1} parent=1 // pred_check_branch
      %41 = sbr.rel (0) target = $region17
    $region16: #{tpu_custom_call.1} parent=1 // pred_region
      %s43 = ssub.s32 1024, 1024
      %44 = vsyncadd [#allocation7], %s43
      %s45 = sshll.u32 [#allocation8], 4
      %s46 = int_to_ptr.vmem [resolvable:$true] %s45
      %51 = dma.hbm_to_vmem [thread:$0]  %s3, 1024, %s46, [#allocation7], 64, 64, 4
    $region17: #{tpu_custom_call.1} parent=1 // pred_fallthru
      _
    // Predicated region
    $region18: #{tpu_custom_call.1} parent=1 // pred_check
      _
    $region19: #{tpu_custom_call.1} parent=1 // pred_check_branch
      %53 = sbr.rel (0) target = $region21
    $region20: #{tpu_custom_call.1} parent=1 // pred_region
      _
    $region21: #{tpu_custom_call.1} parent=1 // pred_fallthru
      _
    // Predicated region
    $region22: #{tpu_custom_call.1} parent=1 // pred_check
      _
    $region23: #{tpu_custom_call.1} parent=1 // pred_check_branch
      %55 = sbr.rel (0) target = $region25
    $region24: #{tpu_custom_call.1} parent=1 // pred_region
      %s57 = ssub.s32 1024, 1024
      %58 = vsyncadd [#allocation10], %s57
      %s59 = sshll.u32 [#allocation9], 4
      %s60 = int_to_ptr.vmem [resolvable:$true] %s59
      %65 = dma.hbm_to_vmem [thread:$0]  %s5, 1024, %s60, [#allocation10], 64, 64, 4
    $region25: #{tpu_custom_call.1} parent=1 // pred_fallthru
      _
    // Predicated region
    $region26: #{tpu_custom_call.1} parent=1 // pred_check
      _
    $region27: #{tpu_custom_call.1} parent=1 // pred_check_branch
      %67 = sbr.rel (0) target = $region29
    $region28: #{tpu_custom_call.1} parent=1 // pred_region
      _
    $region29: #{tpu_custom_call.1} parent=1 // pred_fallthru
      _
    // Predicated region
    $region30: #{tpu_custom_call.1} parent=1 // pred_check
      _
    $region31: #{tpu_custom_call.1} parent=1 // pred_check_branch
      %69 = sbr.rel (0) target = $region33
    $region32: #{tpu_custom_call.1} parent=1 // pred_region
      %70 = dma.done [#allocation4], 64
    $region33: #{tpu_custom_call.1} parent=1 // pred_fallthru
      _
    // Predicated region
    $region34: #{tpu_custom_call.1} parent=1 // pred_check
      _
    $region35: #{tpu_custom_call.1} parent=1 // pred_check_branch
      %72 = sbr.rel (0) target = $region37
    $region36: #{tpu_custom_call.1} parent=1 // pred_region
      %73 = dma.done [#allocation7], 1024
    $region37: #{tpu_custom_call.1} parent=1 // pred_fallthru
      _
    // Predicated region
    $region38: #{tpu_custom_call.1} parent=1 // pred_check
      _
    $region39: #{tpu_custom_call.1} parent=1 // pred_check_branch
      %75 = sbr.rel (0) target = $region41
    $region40: #{tpu_custom_call.1} parent=1 // pred_region
      %76 = dma.done [#allocation7], 1024
    $region41: #{tpu_custom_call.1} parent=1 // pred_fallthru
      _
    // Predicated region
    $region42: #{tpu_custom_call.1} parent=1 // pred_check
      _
    $region43: #{tpu_custom_call.1} parent=1 // pred_check_branch
      %78 = sbr.rel (0) target = $region45
    $region44: #{tpu_custom_call.1} parent=1 // pred_region
      %79 = dma.done [#allocation10], 1024
    $region45: #{tpu_custom_call.1} parent=1 // pred_fallthru
      _
    %p81 = scmp.eq.s32.totalorder 0, 0
    // Predicated region
    $region46: #{tpu_custom_call.1} parent=1 // pred_check
      %p82 = pneg %p81
    $region47: #{tpu_custom_call.1} parent=1 // pred_check_branch
      %84 = sbr.rel (%p82) target = $region49
    $region48: #{tpu_custom_call.1} parent=1 // pred_region
      %85 = vst [vmem:[#allocation2] sm:$0xff] 0.0
    $region49: #{tpu_custom_call.1} parent=1 // pred_fallthru
      _
    %v86 = vld [vmem:[#allocation3] sm:$0xf]
    %v87 = vld [vmem:[#allocation2] sm:$0xff]
    %v88 = vld [vmem:[#allocation6] sm:$0xf]
    %v89 = vld [vmem:[#allocation6 + $0x4] sm:$0xf]
    %v90 = vld [vmem:[#allocation6 + $0x8] sm:$0xf]
    %v91 = vld [vmem:[#allocation6 + $0xc] sm:$0xf]
    %v92 = vld [vmem:[#allocation6 + $0x10] sm:$0xf]
    %v93 = vld [vmem:[#allocation6 + $0x14] sm:$0xf]
    %v94 = vld [vmem:[#allocation6 + $0x18] sm:$0xf]
    %v95 = vld [vmem:[#allocation6 + $0x1c] sm:$0xf]
    %v96 = vld [vmem:[#allocation6 + $0x20] sm:$0xf]
    %v97 = vld [vmem:[#allocation6 + $0x24] sm:$0xf]
    %v98 = vld [vmem:[#allocation6 + $0x28] sm:$0xf]
    %v99 = vld [vmem:[#allocation6 + $0x2c] sm:$0xf]
    %v100 = vld [vmem:[#allocation6 + $0x30] sm:$0xf]
    %v101 = vld [vmem:[#allocation6 + $0x34] sm:$0xf]
    %v102 = vld [vmem:[#allocation6 + $0x38] sm:$0xf]
    %v103 = vld [vmem:[#allocation6 + $0x3c] sm:$0xf]
    %v120 = vunpack.c.l.b16 %v88
    %v121 = vunpack.c.l.b16 %v89
    %v122 = vunpack.c.l.b16 %v90
    %v123 = vunpack.c.l.b16 %v91
    %v124 = vunpack.c.l.b16 %v92
    %v125 = vunpack.c.l.b16 %v93
    %v126 = vunpack.c.l.b16 %v94
    %v127 = vunpack.c.l.b16 %v95
    %v128 = vunpack.c.l.b16 %v96
    %v129 = vunpack.c.l.b16 %v97
    %v130 = vunpack.c.l.b16 %v98
    %v131 = vunpack.c.l.b16 %v99
    %v132 = vunpack.c.l.b16 %v100
    %v133 = vunpack.c.l.b16 %v101
    %v134 = vunpack.c.l.b16 %v102
    %v135 = vunpack.c.l.b16 %v103
    %v136 = vpack.c.b16 %v121, %v120
    %v137 = vpack.c.b16 %v123, %v122
    %v138 = vpack.c.b16 %v125, %v124
    %v139 = vpack.c.b16 %v127, %v126
    %v140 = vpack.c.b16 %v129, %v128
    %v141 = vpack.c.b16 %v131, %v130
    %v142 = vpack.c.b16 %v133, %v132
    %v143 = vpack.c.b16 %v135, %v134
    %152 = vmatprep.subr.bf16.mxu0 0
    %153 = vmatpush1.bf16.msra.mxu0 %v136
    %154 = vmatprep.subr.bf16.mxu0 0
    %155 = vmatpush1.bf16.msra.mxu0 %v137
    %156 = vmatprep.subr.bf16.mxu0 0
    %157 = vmatpush1.bf16.msra.mxu0 %v138
    %158 = vmatprep.subr.bf16.mxu0 0
    %159 = vmatpush1.bf16.msra.mxu0 %v139
    %160 = vmatprep.subr.bf16.mxu0 0
    %161 = vmatpush1.bf16.msra.mxu0 %v140
    %162 = vmatprep.subr.bf16.mxu0 0
    %163 = vmatpush1.bf16.msra.mxu0 %v141
    %164 = vmatprep.subr.bf16.mxu0 0
    %165 = vmatpush1.bf16.msra.mxu0 %v142
    %166 = vmatprep.subr.bf16.mxu0 0
    %167 = vmatpush1.bf16.msra.mxu0 %v143
    %168 = vmatprep.subr.bf16.mxu0 0
    %169 = vmatpush1.bf16.msra.mxu0 0
    %170 = vmatprep.subr.bf16.mxu0 0
    %171 = vmatpush1.bf16.msra.mxu0 0
    %172 = vmatprep.subr.bf16.mxu0 0
    %173 = vmatpush1.bf16.msra.mxu0 0
    %174 = vmatprep.subr.bf16.mxu0 0
    %175 = vmatpush1.bf16.msra.mxu0 0
    %176 = vmatprep.subr.bf16.mxu0 0
    %177 = vmatpush1.bf16.msra.mxu0 0
    %178 = vmatprep.subr.bf16.mxu0 0
    %179 = vmatpush1.bf16.msra.mxu0 0
    %180 = vmatprep.subr.bf16.mxu0 0
    %181 = vmatpush1.bf16.msra.mxu0 0
    %182 = vmatprep.subr.bf16.mxu0 0
    %183 = vmatpush1.bf16.msra.mxu0 0
    %184 = vmatprep.mubr.bf16.mxu0 0
    %185 = vmatmul.mubr.bf16.gmra.mrb[0].mxu0 %v86
    %v186 = vpop.f32.mrb[0].mxu0
    %v187 = vadd.f32 0.0, %v186
    %v188 = vpop.f32.mrb[0].mxu0
    %v189 = vpop.f32.mrb[0].mxu0
    %v190 = vpop.f32.mrb[0].mxu0
    %191 = vdwg.mxu0
    %v192 = vadd.f32 %v87, %v187
    %193 = vst [vmem:[#allocation2] sm:$0xff] %v192
    // Predicated region
    $region50: #{tpu_custom_call.1} parent=1 // pred_check
      %p194 = pneg %p81
    $region51: #{tpu_custom_call.1} parent=1 // pred_check_branch
      %196 = sbr.rel (%p194) target = $region53
    $region52: #{tpu_custom_call.1} parent=1 // pred_region
      %v197 = vld [vmem:[#allocation2] sm:$0xff]
      %v198 = vld [vmem:[%s2] sm:$0x1]
      %v200 = vlaneseq
      %v201 = vshrl.u32 %v200, 7
      %v202 = vsub.s32 0, %v201
      %v203 = vrot.slane %v198, %v202
      %v205 = vadd.f32 %v197, %v203
      %v206 = vmax.f32 %v205, 0.0
      %v207 = vpack.c.bf16 %v206, %v206
      %v208 = vld [vmem:[#allocation8] sm:$0xf]
      %v209 = vld [vmem:[#allocation8 + $0x4] sm:$0xf]
      %v210 = vld [vmem:[#allocation8 + $0x8] sm:$0xf]
      %v211 = vld [vmem:[#allocation8 + $0xc] sm:$0xf]
      %v212 = vld [vmem:[#allocation8 + $0x10] sm:$0xf]
      %v213 = vld [vmem:[#allocation8 + $0x14] sm:$0xf]
      %v214 = vld [vmem:[#allocation8 + $0x18] sm:$0xf]
      %v215 = vld [vmem:[#allocation8 + $0x1c] sm:$0xf]
      %v216 = vld [vmem:[#allocation8 + $0x20] sm:$0xf]
      %v217 = vld [vmem:[#allocation8 + $0x24] sm:$0xf]
      %v218 = vld [vmem:[#allocation8 + $0x28] sm:$0xf]
      %v219 = vld [vmem:[#allocation8 + $0x2c] sm:$0xf]
      %v220 = vld [vmem:[#allocation8 + $0x30] sm:$0xf]
      %v221 = vld [vmem:[#allocation8 + $0x34] sm:$0xf]
      %v222 = vld [vmem:[#allocation8 + $0x38] sm:$0xf]
      %v223 = vld [vmem:[#allocation8 + $0x3c] sm:$0xf]
      %v224 = vld [vmem:[%s4] sm:$0x1]
      %v226 = vlaneseq
      %v227 = vshrl.u32 %v226, 7
      %v228 = vsub.s32 0, %v227
      %v229 = vrot.slane %v224, %v228
      %v247 = vunpack.c.l.b16 %v208
      %v248 = vunpack.c.l.b16 %v209
      %v249 = vunpack.c.l.b16 %v210
      %v250 = vunpack.c.l.b16 %v211
      %v251 = vunpack.c.l.b16 %v212
      %v252 = vunpack.c.l.b16 %v213
      %v253 = vunpack.c.l.b16 %v214
      %v254 = vunpack.c.l.b16 %v215
      %v255 = vunpack.c.l.b16 %v216
      %v256 = vunpack.c.l.b16 %v217
      %v257 = vunpack.c.l.b16 %v218
      %v258 = vunpack.c.l.b16 %v219
      %v259 = vunpack.c.l.b16 %v220
      %v260 = vunpack.c.l.b16 %v221
      %v261 = vunpack.c.l.b16 %v222
      %v262 = vunpack.c.l.b16 %v223
      %v263 = vpack.c.b16 %v248, %v247
      %v264 = vpack.c.b16 %v250, %v249
      %v265 = vpack.c.b16 %v252, %v251
      %v266 = vpack.c.b16 %v254, %v253
      %v267 = vpack.c.b16 %v256, %v255
      %v268 = vpack.c.b16 %v258, %v257
      %v269 = vpack.c.b16 %v260, %v259
      %v270 = vpack.c.b16 %v262, %v261
      %279 = vmatprep.subr.bf16.mxu0 0
      %280 = vmatpush1.bf16.msra.mxu0 %v263
      %281 = vmatprep.subr.bf16.mxu0 0
      %282 = vmatpush1.bf16.msra.mxu0 %v264
      %283 = vmatprep.subr.bf16.mxu0 0
      %284 = vmatpush1.bf16.msra.mxu0 %v265
      %285 = vmatprep.subr.bf16.mxu0 0
      %286 = vmatpush1.bf16.msra.mxu0 %v266
      %287 = vmatprep.subr.bf16.mxu0 0
      %288 = vmatpush1.bf16.msra.mxu0 %v267
      %289 = vmatprep.subr.bf16.mxu0 0
      %290 = vmatpush1.bf16.msra.mxu0 %v268
      %291 = vmatprep.subr.bf16.mxu0 0
      %292 = vmatpush1.bf16.msra.mxu0 %v269
      %293 = vmatprep.subr.bf16.mxu0 0
      %294 = vmatpush1.bf16.msra.mxu0 %v270
      %295 = vmatprep.subr.bf16.mxu0 0
      %296 = vmatpush1.bf16.msra.mxu0 0
      %297 = vmatprep.subr.bf16.mxu0 0
      %298 = vmatpush1.bf16.msra.mxu0 0
      %299 = vmatprep.subr.bf16.mxu0 0
      %300 = vmatpush1.bf16.msra.mxu0 0
      %301 = vmatprep.subr.bf16.mxu0 0
      %302 = vmatpush1.bf16.msra.mxu0 0
      %303 = vmatprep.subr.bf16.mxu0 0
      %304 = vmatpush1.bf16.msra.mxu0 0
      %305 = vmatprep.subr.bf16.mxu0 0
      %306 = vmatpush1.bf16.msra.mxu0 0
      %307 = vmatprep.subr.bf16.mxu0 0
      %308 = vmatpush1.bf16.msra.mxu0 0
      %309 = vmatprep.subr.bf16.mxu0 0
      %310 = vmatpush1.bf16.msra.mxu0 0
      %311 = vmatprep.mubr.bf16.mxu0 0
      %312 = vmatmul.mubr.bf16.gmra.mrb[0].mxu0 %v207
      %v313 = vpop.f32.mrb[0].mxu0
      %v314 = vadd.f32 %v229, %v313
      %v315 = vpop.f32.mrb[0].mxu0
      %v316 = vpop.f32.mrb[0].mxu0
      %v317 = vpop.f32.mrb[0].mxu0
      %318 = vdwg.mxu0
      %v319 = vmax.f32 %v314, 0.0
      %v320 = vpack.c.bf16 %v319, %v319
      %v321 = vld [vmem:[#allocation9] sm:$0xf]
      %v322 = vld [vmem:[#allocation9 + $0x4] sm:$0xf]
      %v323 = vld [vmem:[#allocation9 + $0x8] sm:$0xf]
      %v324 = vld [vmem:[#allocation9 + $0xc] sm:$0xf]
      %v325 = vld [vmem:[#allocation9 + $0x10] sm:$0xf]
      %v326 = vld [vmem:[#allocation9 + $0x14] sm:$0xf]
      %v327 = vld [vmem:[#allocation9 + $0x18] sm:$0xf]
      %v328 = vld [vmem:[#allocation9 + $0x1c] sm:$0xf]
      %v329 = vld [vmem:[#allocation9 + $0x20] sm:$0xf]
      %v330 = vld [vmem:[#allocation9 + $0x24] sm:$0xf]
      %v331 = vld [vmem:[#allocation9 + $0x28] sm:$0xf]
      %v332 = vld [vmem:[#allocation9 + $0x2c] sm:$0xf]
      %v333 = vld [vmem:[#allocation9 + $0x30] sm:$0xf]
      %v334 = vld [vmem:[#allocation9 + $0x34] sm:$0xf]
      %v335 = vld [vmem:[#allocation9 + $0x38] sm:$0xf]
      %v336 = vld [vmem:[#allocation9 + $0x3c] sm:$0xf]
      %v337 = vld [vmem:[%s6] sm:$0x1]
      %v339 = vlaneseq
      %v340 = vshrl.u32 %v339, 7
      %v341 = vsub.s32 0, %v340
      %v342 = vrot.slane %v337, %v341
      %v360 = vunpack.c.l.b16 %v321
      %v361 = vunpack.c.l.b16 %v322
      %v362 = vunpack.c.l.b16 %v323
      %v363 = vunpack.c.l.b16 %v324
      %v364 = vunpack.c.l.b16 %v325
      %v365 = vunpack.c.l.b16 %v326
      %v366 = vunpack.c.l.b16 %v327
      %v367 = vunpack.c.l.b16 %v328
      %v368 = vunpack.c.l.b16 %v329
      %v369 = vunpack.c.l.b16 %v330
      %v370 = vunpack.c.l.b16 %v331
      %v371 = vunpack.c.l.b16 %v332
      %v372 = vunpack.c.l.b16 %v333
      %v373 = vunpack.c.l.b16 %v334
      %v374 = vunpack.c.l.b16 %v335
      %v375 = vunpack.c.l.b16 %v336
      %v376 = vpack.c.b16 %v361, %v360
      %v377 = vpack.c.b16 %v363, %v362
      %v378 = vpack.c.b16 %v365, %v364
      %v379 = vpack.c.b16 %v367, %v366
      %v380 = vpack.c.b16 %v369, %v368
      %v381 = vpack.c.b16 %v371, %v370
      %v382 = vpack.c.b16 %v373, %v372
      %v383 = vpack.c.b16 %v375, %v374
      %392 = vmatprep.subr.bf16.mxu0 0
      %393 = vmatpush1.bf16.msra.mxu0 %v376
      %394 = vmatprep.subr.bf16.mxu0 0
      %395 = vmatpush1.bf16.msra.mxu0 %v377
      %396 = vmatprep.subr.bf16.mxu0 0
      %397 = vmatpush1.bf16.msra.mxu0 %v378
      %398 = vmatprep.subr.bf16.mxu0 0
      %399 = vmatpush1.bf16.msra.mxu0 %v379
      %400 = vmatprep.subr.bf16.mxu0 0
      %401 = vmatpush1.bf16.msra.mxu0 %v380
      %402 = vmatprep.subr.bf16.mxu0 0
      %403 = vmatpush1.bf16.msra.mxu0 %v381
      %404 = vmatprep.subr.bf16.mxu0 0
      %405 = vmatpush1.bf16.msra.mxu0 %v382
      %406 = vmatprep.subr.bf16.mxu0 0
      %407 = vmatpush1.bf16.msra.mxu0 %v383
      %408 = vmatprep.subr.bf16.mxu0 0
      %409 = vmatpush1.bf16.msra.mxu0 0
      %410 = vmatprep.subr.bf16.mxu0 0
      %411 = vmatpush1.bf16.msra.mxu0 0
      %412 = vmatprep.subr.bf16.mxu0 0
      %413 = vmatpush1.bf16.msra.mxu0 0
      %414 = vmatprep.subr.bf16.mxu0 0
      %415 = vmatpush1.bf16.msra.mxu0 0
      %416 = vmatprep.subr.bf16.mxu0 0
      %417 = vmatpush1.bf16.msra.mxu0 0
      %418 = vmatprep.subr.bf16.mxu0 0
      %419 = vmatpush1.bf16.msra.mxu0 0
      %420 = vmatprep.subr.bf16.mxu0 0
      %421 = vmatpush1.bf16.msra.mxu0 0
      %422 = vmatprep.subr.bf16.mxu0 0
      %423 = vmatpush1.bf16.msra.mxu0 0
      %424 = vmatprep.mubr.bf16.mxu0 0
      %425 = vmatmul.mubr.bf16.gmra.mrb[0].mxu0 %v320
      %v426 = vpop.f32.mrb[0].mxu0
      %v427 = vadd.f32 %v342, %v426
      %v428 = vpop.f32.mrb[0].mxu0
      %v429 = vpop.f32.mrb[0].mxu0
      %v430 = vpop.f32.mrb[0].mxu0
      %431 = vdwg.mxu0
      %432 = vst [vmem:[#allocation11] sm:$0xff] %v427
    $region53: #{tpu_custom_call.1} parent=1 // pred_fallthru
      _
    // Predicated region
    $region54: #{tpu_custom_call.1} parent=1 // pred_check
      _
    $region55: #{tpu_custom_call.1} parent=1 // pred_check_branch
      %434 = sbr.rel (0) target = $region57
    $region56: #{tpu_custom_call.1} parent=1 // pred_region
      %s436 = ssub.s32 128, 128
      %437 = vsyncadd [#allocation5], %s436
      %s439 = sshll.u32 [#allocation11], 4
      %s440 = int_to_ptr.vmem [resolvable:$true] %s439
      %442 = dma.vmem_to_hbm [thread:$0]  %s440, 128, %s7, [#allocation5]
    $region57: #{tpu_custom_call.1} parent=1 // pred_fallthru
      _
    // Predicated region
    $region58: #{tpu_custom_call.1} parent=1 // pred_check
      _
    $region59: #{tpu_custom_call.1} parent=1 // pred_check_branch
      %444 = sbr.rel (0) target = $region61
    $region60: #{tpu_custom_call.1} parent=1 // pred_region
      %445 = dma.done [#allocation5], 128
    $region61: #{tpu_custom_call.1} parent=1 // pred_fallthru
      _
    %446 = vsyncpa [#allocation4], 1
    %447 = vsyncpa [#allocation7], 1
    %448 = vsyncpa [#allocation10], 1
    %449 = vsyncpa [#allocation5], 1

</llo_original>
